<compile_context>
chip_gen: v7x
topology: tpu7x:2x2x1
jax: 0.10.0
libtpu: 0.0.40
codegen_flags: <defaults>
</compile_context>

<pallas_src>
import jax
import jax.numpy as jnp
from jax.experimental import pallas as pl
from jax.experimental.pallas import tpu as pltpu


def _round_up(n, m):
    return (n + m - 1) // m * m


def _pad_to(a, shape):
    pads = [(0, t - s) for s, t in zip(a.shape, shape)]
    if all(p == (0, 0) for p in pads):
        return a
    return jnp.pad(a, pads)


def decoder_kernel(x_ref, w1_ref, b1_ref, g_ref, beta_ref, w2_ref, b2_ref, o_ref):
    # ---- Linear 1: [tb, in_p] @ [in_p, hidden] (native dtype -> MXU, f32 acc) ----
    h = jnp.dot(x_ref[...], w1_ref[...], preferred_element_type=jnp.float32)
    h = h + b1_ref[...].astype(jnp.float32)

    # ---- LayerNorm over hidden (f32, eps=1e-5, matches nn.LayerNorm default) ----
    # Single-pass stats: var = E[h^2] - mean^2 (two back-to-back lane reductions).
    hidden = h.shape[-1]
    inv_n = 1.0 / hidden
    mean = jnp.sum(h, axis=-1, keepdims=True) * inv_n
    mean_sq = jnp.sum(h * h, axis=-1, keepdims=True) * inv_n
    var = mean_sq - mean * mean
    inv = jax.lax.rsqrt(var + 1e-5)
    hn = (h - mean) * inv * g_ref[...].astype(jnp.float32) + beta_ref[...].astype(jnp.float32)

    # ---- ReLU (cast back to weight dtype so the MXU eats bf16 directly) ----
    hr = jnp.maximum(hn, 0.0).astype(w2_ref.dtype)

    # ---- Linear 2: [tb, hidden] @ [hidden, out_p] ----
    y = jnp.dot(hr, w2_ref[...], preferred_element_type=jnp.float32)
    y = y + b2_ref[...].astype(jnp.float32)
    o_ref[...] = y.astype(o_ref.dtype)


def decoder_forward(x, params, *, batch_tile=512):
    """x: [B, in_nodes] -> [B, out_nodes] (Linear -> LayerNorm -> ReLU -> Linear)."""
    w1, b1, gamma, beta, w2, b2 = params
    B, in_nodes = x.shape
    hidden = w1.shape[1]
    out_nodes = w2.shape[1]

    # --- lane-dense feature padding (zeros are matmul-neutral; hidden untouched) ---
    in_p = _round_up(in_nodes, 128)
    out_p = _round_up(out_nodes, 128)

    # --- batch tiling: sublane-aligned tile, pad B so every grid step is full ---
    row_align = 16 if x.dtype == jnp.bfloat16 else 8
    tb = max(row_align, min(batch_tile, _round_up(B, row_align)))
    tb = _round_up(tb, row_align)
    B_p = _round_up(B, tb)
    grid = (B_p // tb,)

    x_p = _pad_to(x, (B_p, in_p))
    w1_p = _pad_to(w1, (in_p, hidden))
    w2_p = _pad_to(w2, (hidden, out_p))
    b2_p = _pad_to(b2, (1, out_p))

    # --- VMEM budget: double-buffered x/out tiles + (double-buffered) weights ---
    act_item = jnp.dtype(x.dtype).itemsize
    w_item = jnp.dtype(w1.dtype).itemsize
    vmem_bytes = (
        2 * (tb * in_p + tb * out_p) * act_item
        + 2 * (in_p * hidden + hidden * out_p) * w_item
        + 2 * (3 * hidden + out_p) * w_item
    )
    vmem_limit = int(min(48 * 1024 * 1024, max(32 * 1024 * 1024, 2 * vmem_bytes)))

    out_p_arr = pl.pallas_call(
        decoder_kernel,
        out_shape=jax.ShapeDtypeStruct((B_p, out_p), x.dtype),
        grid_spec=pltpu.PrefetchScalarGridSpec(
            num_scalar_prefetch=0,
            grid=grid,
            in_specs=[
                pl.BlockSpec((tb, in_p), lambda i: (i, 0)),        # x tile (pipelined)
                pl.BlockSpec((in_p, hidden), lambda i: (0, 0)),    # W1 (grid-invariant)
                pl.BlockSpec((1, hidden), lambda i: (0, 0)),       # b1
                pl.BlockSpec((1, hidden), lambda i: (0, 0)),       # gamma
                pl.BlockSpec((1, hidden), lambda i: (0, 0)),       # beta
                pl.BlockSpec((hidden, out_p), lambda i: (0, 0)),   # W2
                pl.BlockSpec((1, out_p), lambda i: (0, 0)),        # b2
            ],
            out_specs=pl.BlockSpec((tb, out_p), lambda i: (i, 0)),  # lane-dense output
        ),
        compiler_params=pltpu.CompilerParams(
            dimension_semantics=("parallel",),
            vmem_limit_bytes=vmem_limit,
        ),
    )(x_p, w1_p, b1, gamma, beta, w2_p, b2_p)

    # strip batch / feature padding
    return out_p_arr[:B, :out_nodes]


def init_decoder_params(key, in_nodes, hidden_nodes, out_nodes, dtype=jnp.float32):
    """Deterministic init mirroring nn.Linear (uniform +-1/sqrt(fan_in)) and
    nn.LayerNorm (gamma=1, beta=0). Weights stored [in, out]."""
    k1, k2, k3, k4 = jax.random.split(key, 4)
    bound1 = 1.0 / (in_nodes ** 0.5)
    bound2 = 1.0 / (hidden_nodes ** 0.5)
    w1 = jax.random.uniform(k1, (in_nodes, hidden_nodes), dtype, -bound1, bound1)
    b1 = jax.random.uniform(k2, (1, hidden_nodes), dtype, -bound1, bound1)
    gamma = jnp.ones((1, hidden_nodes), dtype)
    beta = jnp.zeros((1, hidden_nodes), dtype)
    w2 = jax.random.uniform(k3, (hidden_nodes, out_nodes), dtype, -bound2, bound2)
    b2 = jax.random.uniform(k4, (1, out_nodes), dtype, -bound2, bound2)
    return (w1, b1, gamma, beta, w2, b2)


def decoder_ref(x, params):
    """Pure-JAX reference for correctness check."""
    w1, b1, gamma, beta, w2, b2 = params
    h = x.astype(jnp.float32) @ w1.astype(jnp.float32) + b1.astype(jnp.float32)
    mean = jnp.mean(h, axis=-1, keepdims=True)
    var = jnp.mean((h - mean) ** 2, axis=-1, keepdims=True)
    hn = (h - mean) * jax.lax.rsqrt(var + 1e-5) * gamma + beta
    hr = jnp.maximum(hn, 0.0)
    return (hr @ w2.astype(jnp.float32) + b2.astype(jnp.float32)).astype(x.dtype)


if __name__ == "__main__":
    key = jax.random.PRNGKey(0)
    kx, kp = jax.random.split(key)

    batch, in_nodes, hidden_nodes, out_nodes = 8, 32, 64, 16
    x = jax.random.normal(kx, (batch, in_nodes), jnp.float32)
    params = init_decoder_params(kp, in_nodes, hidden_nodes, out_nodes)

    y = decoder_forward(x, params)
    y = jax.block_until_ready(y)

    y_ref = decoder_ref(x, params)
    assert y.shape == (batch, out_nodes)
    assert jnp.allclose(y, y_ref, atol=1e-4, rtol=1e-4)

    # also exercise a ragged, multi-tile batch path
    x2 = jax.random.normal(kx, (37, in_nodes), jnp.float32)
    y2 = jax.block_until_ready(decoder_forward(x2, params, batch_tile=16))
    assert y2.shape == (37, out_nodes)
    assert jnp.allclose(y2, decoder_ref(x2, params), atol=1e-4, rtol=1e-4)

    print("KERNEL_OK")
</pallas_src>

<mosaic_0001>
module attributes {stable_mosaic.version = 11 : i64} {
  func.func @decoder_kernel(%arg0: i32, %arg1: memref<8x128xf32, #tpu.memory_space<vmem>>, %arg2: memref<128x64xf32, #tpu.memory_space<vmem>>, %arg3: memref<1x64xf32, #tpu.memory_space<vmem>>, %arg4: memref<1x64xf32, #tpu.memory_space<vmem>>, %arg5: memref<1x64xf32, #tpu.memory_space<vmem>>, %arg6: memref<64x128xf32, #tpu.memory_space<vmem>>, %arg7: memref<1x128xf32, #tpu.memory_space<vmem>>, %arg8: memref<8x128xf32, #tpu.memory_space<vmem>>) attributes {dimension_semantics = [#tpu.dimension_semantics<parallel>], iteration_bounds = array<i64: 1>, scalar_prefetch = 0 : i64, scratch_operands = 0 : i64, tpu.core_type = #tpu.core_type<tc>, window_params = [{transform_indices = @transform_0, window_bounds = array<i64: 8, 128>}, {pipeline_mode = #tpu.pipeline_mode<synchronous>, transform_indices = @transform_1, window_bounds = array<i64: 128, 64>}, {pipeline_mode = #tpu.pipeline_mode<synchronous>, transform_indices = @transform_2, window_bounds = array<i64: 1, 64>}, {pipeline_mode = #tpu.pipeline_mode<synchronous>, transform_indices = @transform_3, window_bounds = array<i64: 1, 64>}, {pipeline_mode = #tpu.pipeline_mode<synchronous>, transform_indices = @transform_4, window_bounds = array<i64: 1, 64>}, {pipeline_mode = #tpu.pipeline_mode<synchronous>, transform_indices = @transform_5, window_bounds = array<i64: 64, 128>}, {pipeline_mode = #tpu.pipeline_mode<synchronous>, transform_indices = @transform_6, window_bounds = array<i64: 1, 128>}, {transform_indices = @transform_7, window_bounds = array<i64: 8, 128>}]} {
    %c0 = arith.constant 0 : index
    %c0_0 = arith.constant 0 : index
    %0 = vector.load %arg1[%c0, %c0_0] : memref<8x128xf32, #tpu.memory_space<vmem>>, vector<8x128xf32>
    %c0_1 = arith.constant 0 : index
    %c0_2 = arith.constant 0 : index
    %1 = vector.load %arg2[%c0_1, %c0_2] : memref<128x64xf32, #tpu.memory_space<vmem>>, vector<128x64xf32>
    %cst = arith.constant dense<0.000000e+00> : vector<8x64xf32>
    %2 = tpu.matmul %0, %1, %cst {dimension_numbers = #tpu.dot_dimension_numbers<[1], [0], [0], [1], [0, 0, 1, 1], [], []>} : vector<8x128xf32>, vector<128x64xf32>, vector<8x64xf32> -> vector<8x64xf32>
    %c0_3 = arith.constant 0 : index
    %c0_4 = arith.constant 0 : index
    %3 = vector.load %arg3[%c0_3, %c0_4] : memref<1x64xf32, #tpu.memory_space<vmem>>, vector<1x64xf32>
    %4 = vector.broadcast %3 : vector<1x64xf32> to vector<8x64xf32>
    %5 = arith.addf %2, %4 : vector<8x64xf32>
    %cst_5 = arith.constant dense<0.000000e+00> : vector<8xf32>
    %6 = vector.multi_reduction <add>, %5, %cst_5 [1] : vector<8x64xf32> to vector<8xf32>
    %7 = vector.shape_cast %6 : vector<8xf32> to vector<8x1xf32>
    %cst_6 = arith.constant 1.562500e-02 : f32
    %8 = vector.broadcast %cst_6 : f32 to vector<8x1xf32>
    %9 = arith.mulf %7, %8 : vector<8x1xf32>
    %10 = arith.mulf %5, %5 : vector<8x64xf32>
    %cst_7 = arith.constant dense<0.000000e+00> : vector<8xf32>
    %11 = vector.multi_reduction <add>, %10, %cst_7 [1] : vector<8x64xf32> to vector<8xf32>
    %12 = vector.shape_cast %11 : vector<8xf32> to vector<8x1xf32>
    %cst_8 = arith.constant 1.562500e-02 : f32
    %13 = vector.broadcast %cst_8 : f32 to vector<8x1xf32>
    %14 = arith.mulf %12, %13 : vector<8x1xf32>
    %15 = arith.mulf %9, %9 : vector<8x1xf32>
    %16 = arith.subf %14, %15 : vector<8x1xf32>
    %cst_9 = arith.constant 9.99999974E-6 : f32
    %17 = vector.broadcast %cst_9 : f32 to vector<8x1xf32>
    %18 = arith.addf %16, %17 : vector<8x1xf32>
    %19 = math.rsqrt %18 : vector<8x1xf32>
    %20 = vector.broadcast %9 : vector<8x1xf32> to vector<8x64xf32>
    %21 = arith.subf %5, %20 : vector<8x64xf32>
    %22 = vector.broadcast %19 : vector<8x1xf32> to vector<8x64xf32>
    %23 = arith.mulf %21, %22 : vector<8x64xf32>
    %c0_10 = arith.constant 0 : index
    %c0_11 = arith.constant 0 : index
    %24 = vector.load %arg4[%c0_10, %c0_11] : memref<1x64xf32, #tpu.memory_space<vmem>>, vector<1x64xf32>
    %25 = vector.broadcast %24 : vector<1x64xf32> to vector<8x64xf32>
    %26 = arith.mulf %23, %25 : vector<8x64xf32>
    %c0_12 = arith.constant 0 : index
    %c0_13 = arith.constant 0 : index
    %27 = vector.load %arg5[%c0_12, %c0_13] : memref<1x64xf32, #tpu.memory_space<vmem>>, vector<1x64xf32>
    %28 = vector.broadcast %27 : vector<1x64xf32> to vector<8x64xf32>
    %29 = arith.addf %26, %28 : vector<8x64xf32>
    %cst_14 = arith.constant 0.000000e+00 : f32
    %30 = vector.broadcast %cst_14 : f32 to vector<8x64xf32>
    %31 = arith.maximumf %29, %30 : vector<8x64xf32>
    %c0_15 = arith.constant 0 : index
    %c0_16 = arith.constant 0 : index
    %32 = vector.load %arg6[%c0_15, %c0_16] : memref<64x128xf32, #tpu.memory_space<vmem>>, vector<64x128xf32>
    %cst_17 = arith.constant dense<0.000000e+00> : vector<8x128xf32>
    %33 = tpu.matmul %31, %32, %cst_17 {dimension_numbers = #tpu.dot_dimension_numbers<[1], [0], [0], [1], [0, 0, 1, 1], [], []>} : vector<8x64xf32>, vector<64x128xf32>, vector<8x128xf32> -> vector<8x128xf32>
    %c0_18 = arith.constant 0 : index
    %c0_19 = arith.constant 0 : index
    %34 = vector.load %arg7[%c0_18, %c0_19] : memref<1x128xf32, #tpu.memory_space<vmem>>, vector<1x128xf32>
    %35 = vector.broadcast %34 : vector<1x128xf32> to vector<8x128xf32>
    %36 = arith.addf %33, %35 : vector<8x128xf32>
    %c0_20 = arith.constant 0 : index
    %c0_21 = arith.constant 0 : index
    %37 = vector.load %arg8[%c0_20, %c0_21] : memref<8x128xf32, #tpu.memory_space<vmem>>, vector<8x128xf32>
    tpu.vector_store %arg8[%c0_20, %c0_21], %36 {strides = array<i32>} : memref<8x128xf32, #tpu.memory_space<vmem>>, vector<8x128xf32>,
    return
  }
  func.func @transform_0(%arg0: i32) -> (i32, i32) {
    %c0_i32 = arith.constant 0 : i32
    %c0_i32_0 = arith.constant 0 : i32
    return %arg0, %c0_i32 : i32, i32
  }
  func.func @transform_1(%arg0: i32) -> (i32, i32) {
    %c0_i32 = arith.constant 0 : i32
    %c0_i32_0 = arith.constant 0 : i32
    %c0_i32_1 = arith.constant 0 : i32
    return %c0_i32, %c0_i32_0 : i32, i32
  }
  func.func @transform_2(%arg0: i32) -> (i32, i32) {
    %c0_i32 = arith.constant 0 : i32
    %c0_i32_0 = arith.constant 0 : i32
    %c0_i32_1 = arith.constant 0 : i32
    return %c0_i32, %c0_i32_0 : i32, i32
  }
  func.func @transform_3(%arg0: i32) -> (i32, i32) {
    %c0_i32 = arith.constant 0 : i32
    %c0_i32_0 = arith.constant 0 : i32
    %c0_i32_1 = arith.constant 0 : i32
    return %c0_i32, %c0_i32_0 : i32, i32
  }
  func.func @transform_4(%arg0: i32) -> (i32, i32) {
    %c0_i32 = arith.constant 0 : i32
    %c0_i32_0 = arith.constant 0 : i32
    %c0_i32_1 = arith.constant 0 : i32
    return %c0_i32, %c0_i32_0 : i32, i32
  }
  func.func @transform_5(%arg0: i32) -> (i32, i32) {
    %c0_i32 = arith.constant 0 : i32
    %c0_i32_0 = arith.constant 0 : i32
    %c0_i32_1 = arith.constant 0 : i32
    return %c0_i32, %c0_i32_0 : i32, i32
  }
  func.func @transform_6(%arg0: i32) -> (i32, i32) {
    %c0_i32 = arith.constant 0 : i32
    %c0_i32_0 = arith.constant 0 : i32
    %c0_i32_1 = arith.constant 0 : i32
    return %c0_i32, %c0_i32_0 : i32, i32
  }
  func.func @transform_7(%arg0: i32) -> (i32, i32) {
    %c0_i32 = arith.constant 0 : i32
    %c0_i32_0 = arith.constant 0 : i32
    return %arg0, %c0_i32 : i32, i32
  }
}

</mosaic_0001>

<llo_original>
// kernel: tpu_custom_call.1
$region0: #{tpu_custom_call.1}
  #allocation0 [shape = 'u32[]', space=smem, size = 0x4, offset = 0x4, fixed_abs, tag = 'smem constant byte address 0x4 - core index']
  #allocation1 [shape = 'u32[144,128]{1,0:T(1,128)}', space=vmem, size = 0x12000, scoped, tag = 'internal scratch']
  %s0 = inlined_call_operand.vmem [shape: f32[8,128], index: 0, kind: input, shape index: {}]
  %s1 = inlined_call_operand.vmem [shape: f32[128,64], index: 1, kind: input, shape index: {}]
  %s2 = inlined_call_operand.vmem [shape: f32[1,64], index: 2, kind: input, shape index: {}]
  %s3 = inlined_call_operand.vmem [shape: f32[1,64], index: 3, kind: input, shape index: {}]
  %s4 = inlined_call_operand.vmem [shape: f32[1,64], index: 4, kind: input, shape index: {}]
  %s5 = inlined_call_operand.vmem [shape: f32[64,128], index: 5, kind: input, shape index: {}]
  %s6 = inlined_call_operand.vmem [shape: f32[1,128], index: 6, kind: input, shape index: {}]
  %s7 = inlined_call_operand.hbm [shape: f32[8,128], index: 7, kind: output, shape index: {}]
  %s8 = sld [smem:[#allocation0]]
  $region38: #{tpu_custom_call.1} parent=0
    _
  %s10 = ssub.s32 1, %s8
  %s11 = scalar_select 0, %s10, %s8
  $region1: #{tpu_custom_call.1} parent=0
    #allocation2 [shape = 'u8[4096]{0}', space=vmem, size = 0x1000, scoped, tag = 'output window, operand 0, single buffered']
    #allocation3 [shape = 's32[1]{0}', space=sflag, size = 0x4, scoped, tag = 'scoped memory for tpu_custom_call.1']
    %12 = vsyncpa [#allocation3], 0
    // Predicated region
    $region2: #{tpu_custom_call.1} parent=1 // pred_check
      _
    $region3: #{tpu_custom_call.1} parent=1 // pred_check_branch
      %14 = sbr.rel (0) target = $region5
    $region4: #{tpu_custom_call.1} parent=1 // pred_region
      _
    $region5: #{tpu_custom_call.1} parent=1 // pred_fallthru
      _
    // Predicated region
    $region6: #{tpu_custom_call.1} parent=1 // pred_check
      _
    $region7: #{tpu_custom_call.1} parent=1 // pred_check_branch
      %16 = sbr.rel (0) target = $region9
    $region8: #{tpu_custom_call.1} parent=1 // pred_region
      _
    $region9: #{tpu_custom_call.1} parent=1 // pred_fallthru
      _
    // Predicated region
    $region10: #{tpu_custom_call.1} parent=1 // pred_check
      _
    $region11: #{tpu_custom_call.1} parent=1 // pred_check_branch
      %18 = sbr.rel (0) target = $region13
    $region12: #{tpu_custom_call.1} parent=1 // pred_region
      _
    $region13: #{tpu_custom_call.1} parent=1 // pred_fallthru
      _
    // Predicated region
    $region14: #{tpu_custom_call.1} parent=1 // pred_check
      _
    $region15: #{tpu_custom_call.1} parent=1 // pred_check_branch
      %20 = sbr.rel (0) target = $region17
    $region16: #{tpu_custom_call.1} parent=1 // pred_region
      _
    $region17: #{tpu_custom_call.1} parent=1 // pred_fallthru
      _
    // Predicated region
    $region18: #{tpu_custom_call.1} parent=1 // pred_check
      _
    $region19: #{tpu_custom_call.1} parent=1 // pred_check_branch
      %22 = sbr.rel (0) target = $region21
    $region20: #{tpu_custom_call.1} parent=1 // pred_region
      _
    $region21: #{tpu_custom_call.1} parent=1 // pred_fallthru
      _
    // Predicated region
    $region22: #{tpu_custom_call.1} parent=1 // pred_check
      _
    $region23: #{tpu_custom_call.1} parent=1 // pred_check_branch
      %24 = sbr.rel (0) target = $region25
    $region24: #{tpu_custom_call.1} parent=1 // pred_region
      _
    $region25: #{tpu_custom_call.1} parent=1 // pred_fallthru
      _
    // Predicated region
    $region26: #{tpu_custom_call.1} parent=1 // pred_check
      _
    $region27: #{tpu_custom_call.1} parent=1 // pred_check_branch
      %26 = sbr.rel (0) target = $region29
    $region28: #{tpu_custom_call.1} parent=1 // pred_region
      _
    $region29: #{tpu_custom_call.1} parent=1 // pred_fallthru
      _
    %v27 = vld [vmem:[%s0] sm:$0xff]
    %v28 = vld [vmem:[%s1] sm:$0xff]
    %v29 = vld [vmem:[%s1 + $0x8] sm:$0xff]
    %v30 = vld [vmem:[%s1 + $0x10] sm:$0xff]
    %v31 = vld [vmem:[%s1 + $0x18] sm:$0xff]
    %v32 = vld [vmem:[%s1 + $0x20] sm:$0xff]
    %v33 = vld [vmem:[%s1 + $0x28] sm:$0xff]
    %v34 = vld [vmem:[%s1 + $0x30] sm:$0xff]
    %v35 = vld [vmem:[%s1 + $0x38] sm:$0xff]
    %v36 = vld [vmem:[%s1 + $0x40] sm:$0xff]
    %v37 = vld [vmem:[%s1 + $0x48] sm:$0xff]
    %v38 = vld [vmem:[%s1 + $0x50] sm:$0xff]
    %v39 = vld [vmem:[%s1 + $0x58] sm:$0xff]
    %v40 = vld [vmem:[%s1 + $0x60] sm:$0xff]
    %v41 = vld [vmem:[%s1 + $0x68] sm:$0xff]
    %v42 = vld [vmem:[%s1 + $0x70] sm:$0xff]
    %v43 = vld [vmem:[%s1 + $0x78] sm:$0xff]
    %v44 = vld [vmem:[%s2] sm:$0x1]
    %v46 = vlaneseq
    %v47 = vshrl.u32 %v46, 7
    %v48 = vsub.s32 0, %v47
    %v49 = vrot.slane %v44, %v48
    %51 = vmatprep.subr.mxu0 0.0
    %52 = vmatpush1.msra.mxu0 %v28
    %53 = vmatprep.subr.mxu0 0.0
    %54 = vmatpush1.msra.mxu0 %v29
    %55 = vmatprep.subr.mxu0 0.0
    %56 = vmatpush1.msra.mxu0 %v30
    %57 = vmatprep.subr.mxu0 0.0
    %58 = vmatpush1.msra.mxu0 %v31
    %59 = vmatprep.subr.mxu0 0.0
    %60 = vmatpush1.msra.mxu0 %v32
    %61 = vmatprep.subr.mxu0 0.0
    %62 = vmatpush1.msra.mxu0 %v33
    %63 = vmatprep.subr.mxu0 0.0
    %64 = vmatpush1.msra.mxu0 %v34
    %65 = vmatprep.subr.mxu0 0.0
    %66 = vmatpush1.msra.mxu0 %v35
    %67 = vmatprep.subr.mxu0 0.0
    %68 = vmatpush1.msra.mxu0 %v36
    %69 = vmatprep.subr.mxu0 0.0
    %70 = vmatpush1.msra.mxu0 %v37
    %71 = vmatprep.subr.mxu0 0.0
    %72 = vmatpush1.msra.mxu0 %v38
    %73 = vmatprep.subr.mxu0 0.0
    %74 = vmatpush1.msra.mxu0 %v39
    %75 = vmatprep.subr.mxu0 0.0
    %76 = vmatpush1.msra.mxu0 %v40
    %77 = vmatprep.subr.mxu0 0.0
    %78 = vmatpush1.msra.mxu0 %v41
    %79 = vmatprep.subr.mxu0 0.0
    %80 = vmatpush1.msra.mxu0 %v42
    %81 = vmatprep.subr.mxu0 0.0
    %82 = vmatpush1.msra.mxu0 %v43
    %83 = vmatprep.subr.mxu0 0.0
    %84 = vmatpush1.msra.mxu0 0.0
    %85 = vmatprep.subr.mxu0 0.0
    %86 = vmatpush1.msra.mxu0 0.0
    %87 = vmatprep.subr.mxu0 0.0
    %88 = vmatpush1.msra.mxu0 0.0
    %89 = vmatprep.subr.mxu0 0.0
    %90 = vmatpush1.msra.mxu0 0.0
    %91 = vmatprep.subr.mxu0 0.0
    %92 = vmatpush1.msra.mxu0 0.0
    %93 = vmatprep.subr.mxu0 0.0
    %94 = vmatpush1.msra.mxu0 0.0
    %95 = vmatprep.subr.mxu0 0.0
    %96 = vmatpush1.msra.mxu0 0.0
    %97 = vmatprep.subr.mxu0 0.0
    %98 = vmatpush1.msra.mxu0 0.0
    %99 = vmatprep.subr.mxu0 0.0
    %100 = vmatpush1.msra.mxu0 0.0
    %101 = vmatprep.subr.mxu0 0.0
    %102 = vmatpush1.msra.mxu0 0.0
    %103 = vmatprep.subr.mxu0 0.0
    %104 = vmatpush1.msra.mxu0 0.0
    %105 = vmatprep.subr.mxu0 0.0
    %106 = vmatpush1.msra.mxu0 0.0
    %107 = vmatprep.subr.mxu0 0.0
    %108 = vmatpush1.msra.mxu0 0.0
    %109 = vmatprep.subr.mxu0 0.0
    %110 = vmatpush1.msra.mxu0 0.0
    %111 = vmatprep.subr.mxu0 0.0
    %112 = vmatpush1.msra.mxu0 0.0
    %113 = vmatprep.subr.mxu0 0.0
    %114 = vmatpush1.msra.mxu0 0.0
    %115 = vmatprep.mubr.f32.mxu0 0.0
    %116 = vmatmul.mubr.f32.gmra.mrb[0].mxu0 %v27
    %v117 = vpop.f32.mrb[0].mxu0
    %v118 = vadd.f32 %v49, %v117
    %v119 = vpop.f32.mrb[0].mxu0
    %120 = vdwg.mxu0
    %vm121 = vcmask 523264
    %v122 = vsel %vm121, %v118, 0.0
    %123 = vadd.xlane.f32.xlu0 %v122
    %v124 = vpop.xlane.xlu0 %123
    %v125 = vmul.f32 %v124, 0.015625
    %v126 = vmul.f32 %v118, %v118
    %v127 = vsel %vm121, %v126, 0.0
    %128 = vadd.xlane.f32.xlu0 %v127
    %v129 = vpop.xlane.xlu0 %128
    %v130 = vmul.f32 %v129, 0.015625
    %v131 = vmul.f32 %v125, %v125
    %v132 = vsub.f32 %v130, %v131
    %v133 = vadd.f32 %v132, 1e-05
    %v134 = vrsqrt.pop %v133
    %v135 = vsub.f32 %v118, %v125
    %v136 = vmul.f32 %v135, %v134
    %v137 = vld [vmem:[%s3] sm:$0x1]
    %v139 = vlaneseq
    %v140 = vshrl.u32 %v139, 7
    %v141 = vsub.s32 0, %v140
    %v142 = vrot.slane %v137, %v141
    %v144 = vmul.f32 %v136, %v142
    %v145 = vld [vmem:[%s4] sm:$0x1]
    %v147 = vlaneseq
    %v148 = vshrl.u32 %v147, 7
    %v149 = vsub.s32 0, %v148
    %v150 = vrot.slane %v145, %v149
    %v152 = vadd.f32 %v144, %v150
    %v153 = vmax.f32 %v152, 0.0
    %v154 = vld [vmem:[%s5] sm:$0xff]
    %v155 = vld [vmem:[%s5 + $0x8] sm:$0xff]
    %v156 = vld [vmem:[%s5 + $0x10] sm:$0xff]
    %v157 = vld [vmem:[%s5 + $0x18] sm:$0xff]
    %v158 = vld [vmem:[%s5 + $0x20] sm:$0xff]
    %v159 = vld [vmem:[%s5 + $0x28] sm:$0xff]
    %v160 = vld [vmem:[%s5 + $0x30] sm:$0xff]
    %v161 = vld [vmem:[%s5 + $0x38] sm:$0xff]
    %v162 = vld [vmem:[%s6] sm:$0x1]
    %v164 = vlaneseq
    %v165 = vshrl.u32 %v164, 7
    %v166 = vsub.s32 0, %v165
    %v167 = vrot.slane %v162, %v166
    %v170 = vsel %vm121, %v153, 0
    %172 = vmatprep.subr.mxu0 0.0
    %173 = vmatpush1.msra.mxu0 %v154
    %174 = vmatprep.subr.mxu0 0.0
    %175 = vmatpush1.msra.mxu0 %v155
    %176 = vmatprep.subr.mxu0 0.0
    %177 = vmatpush1.msra.mxu0 %v156
    %178 = vmatprep.subr.mxu0 0.0
    %179 = vmatpush1.msra.mxu0 %v157
    %180 = vmatprep.subr.mxu0 0.0
    %181 = vmatpush1.msra.mxu0 %v158
    %182 = vmatprep.subr.mxu0 0.0
    %183 = vmatpush1.msra.mxu0 %v159
    %184 = vmatprep.subr.mxu0 0.0
    %185 = vmatpush1.msra.mxu0 %v160
    %186 = vmatprep.subr.mxu0 0.0
    %187 = vmatpush1.msra.mxu0 %v161
    %188 = vmatprep.subr.mxu0 0.0
    %189 = vmatpush1.msra.mxu0 0.0
    %190 = vmatprep.subr.mxu0 0.0
    %191 = vmatpush1.msra.mxu0 0.0
    %192 = vmatprep.subr.mxu0 0.0
    %193 = vmatpush1.msra.mxu0 0.0
    %194 = vmatprep.subr.mxu0 0.0
    %195 = vmatpush1.msra.mxu0 0.0
    %196 = vmatprep.subr.mxu0 0.0
    %197 = vmatpush1.msra.mxu0 0.0
    %198 = vmatprep.subr.mxu0 0.0
    %199 = vmatpush1.msra.mxu0 0.0
    %200 = vmatprep.subr.mxu0 0.0
    %201 = vmatpush1.msra.mxu0 0.0
    %202 = vmatprep.subr.mxu0 0.0
    %203 = vmatpush1.msra.mxu0 0.0
    %204 = vmatprep.subr.mxu0 0.0
    %205 = vmatpush1.msra.mxu0 0.0
    %206 = vmatprep.subr.mxu0 0.0
    %207 = vmatpush1.msra.mxu0 0.0
    %208 = vmatprep.subr.mxu0 0.0
    %209 = vmatpush1.msra.mxu0 0.0
    %210 = vmatprep.subr.mxu0 0.0
    %211 = vmatpush1.msra.mxu0 0.0
    %212 = vmatprep.subr.mxu0 0.0
    %213 = vmatpush1.msra.mxu0 0.0
    %214 = vmatprep.subr.mxu0 0.0
    %215 = vmatpush1.msra.mxu0 0.0
    %216 = vmatprep.subr.mxu0 0.0
    %217 = vmatpush1.msra.mxu0 0.0
    %218 = vmatprep.subr.mxu0 0.0
    %219 = vmatpush1.msra.mxu0 0.0
    %220 = vmatprep.subr.mxu0 0.0
    %221 = vmatpush1.msra.mxu0 0.0
    %222 = vmatprep.subr.mxu0 0.0
    %223 = vmatpush1.msra.mxu0 0.0
    %224 = vmatprep.subr.mxu0 0.0
    %225 = vmatpush1.msra.mxu0 0.0
    %226 = vmatprep.subr.mxu0 0.0
    %227 = vmatpush1.msra.mxu0 0.0
    %228 = vmatprep.subr.mxu0 0.0
    %229 = vmatpush1.msra.mxu0 0.0
    %230 = vmatprep.subr.mxu0 0.0
    %231 = vmatpush1.msra.mxu0 0.0
    %232 = vmatprep.subr.mxu0 0.0
    %233 = vmatpush1.msra.mxu0 0.0
    %234 = vmatprep.subr.mxu0 0.0
    %235 = vmatpush1.msra.mxu0 0.0
    %236 = vmatprep.mubr.f32.mxu0 0.0
    %237 = vmatmul.mubr.f32.gmra.mrb[0].mxu0 %v170
    %v238 = vpop.f32.mrb[0].mxu0
    %v239 = vadd.f32 %v167, %v238
    %v240 = vpop.f32.mrb[0].mxu0
    %241 = vdwg.mxu0
    %242 = vst [vmem:[#allocation2] sm:$0xff] %v239
    // Predicated region
    $region30: #{tpu_custom_call.1} parent=1 // pred_check
      _
    $region31: #{tpu_custom_call.1} parent=1 // pred_check_branch
      %244 = sbr.rel (0) target = $region33
    $region32: #{tpu_custom_call.1} parent=1 // pred_region
      %s246 = ssub.s32 128, 128
      %247 = vsyncadd [#allocation3], %s246
      %s249 = sshll.u32 [#allocation2], 4
      %s250 = int_to_ptr.vmem [resolvable:$true] %s249
      %252 = dma.vmem_to_hbm [thread:$0]  %s250, 128, %s7, [#allocation3]
    $region33: #{tpu_custom_call.1} parent=1 // pred_fallthru
      _
    // Predicated region
    $region34: #{tpu_custom_call.1} parent=1 // pred_check
      _
    $region35: #{tpu_custom_call.1} parent=1 // pred_check_branch
      %254 = sbr.rel (0) target = $region37
    $region36: #{tpu_custom_call.1} parent=1 // pred_region
      %255 = dma.done [#allocation3], 128
    $region37: #{tpu_custom_call.1} parent=1 // pred_fallthru
      _
    %256 = vsyncpa [#allocation3], 1

</llo_original>
